<compile_context>
chip_gen: v7x
topology: tpu7x:2x2x1
jax: 0.10.0
libtpu: 0.0.40
codegen_flags: <defaults>
</compile_context>

<pallas_src>
import jax
import jax.numpy as jnp
from jax.experimental import pallas as pl
from jax.experimental.pallas import tpu as pltpu


def _patch_embed_kernel(x_ref, wx_ref, b1_ref, w2_ref, bo_ref, o_ref):
    """One row-tile of the fused residual MLP (all operands lane-folded).

      t   = x @ [W1f | Wrf]                 (single x-side MXU pass)
      hid = relu(t[:, :Hf] + b1f)
      out = hid @ W2f + t[:, Hf:] + (b2 + br)f     # dropout(p=0) == identity
    """
    hf = w2_ref.shape[0]                       # folded hidden width (static)

    x = x_ref[...]                             # native dtype -> MXU, f32 accumulate
    t = jnp.dot(x, wx_ref[...], preferred_element_type=jnp.float32)

    hid = jnp.maximum(t[:, :hf] + b1_ref[...], 0.0)   # f32 bias + ReLU (VPU/f32)
    res = t[:, hf:]                                    # 128-lane aligned slice

    out = jnp.dot(hid.astype(w2_ref.dtype), w2_ref[...],
                  preferred_element_type=jnp.float32)
    out = out + res + bo_ref[...]

    o_ref[...] = out.astype(o_ref.dtype)       # natively folded, lane-dense store


def _round_up(x, m):
    return ((x + m - 1) // m) * m


def _cdiv(a, b):
    return (a + b - 1) // b


@jax.jit
def patch_embedding(x, w1, b1, w2, b2, wr, br):
    """Fused PatchEmbedding forward.

    x  : (batch, seq, in_dim)
    w1 : (in_dim, h_dim),   b1 : (h_dim,)      -- weights pre-transposed (W^T)
    w2 : (h_dim, out_dim),  b2 : (out_dim,)
    wr : (in_dim, out_dim), br : (out_dim,)
    returns (batch, seq, out_dim)
    """
    batch, seq, in_dim = x.shape
    h_dim = w1.shape[1]
    out_dim = w2.shape[1]
    M = batch * seq
    x_itemsize = jnp.dtype(x.dtype).itemsize
    w_itemsize = jnp.dtype(w1.dtype).itemsize

    # ---- lane-fold factor ---------------------------------------------------
    # Pack `fold` consecutive rows into the 128-lane axis and replicate the
    # weights block-diagonally; guard the (tiny) block-diag weight footprint.
    if in_dim < 128 and 128 % in_dim == 0:
        fold = 128 // in_dim
        while fold > 1 and (fold * in_dim * fold * (h_dim + out_dim)
                            + fold * h_dim * fold * out_dim) * w_itemsize > (8 << 20):
            fold //= 2
    else:
        fold = 1                                # fallback: unfolded shapes

    kf = fold * in_dim                          # folded K      (128 here)
    hf = fold * h_dim                           # folded hidden (256 here)
    nf = fold * out_dim                         # folded N      (256 here)

    # ---- folded weights / biases (block-diagonal replicas, built per call) --
    w1f = jnp.kron(jnp.eye(fold, dtype=w1.dtype), w1)           # (kf, hf)
    wrf = jnp.kron(jnp.eye(fold, dtype=wr.dtype), wr)           # (kf, nf)
    wxf = jnp.concatenate([w1f, wrf], axis=1)                   # (kf, hf + nf)
    w2f = jnp.kron(jnp.eye(fold, dtype=w2.dtype), w2)           # (hf, nf)
    b1f = jnp.tile(b1.astype(jnp.float32), fold).reshape(1, hf)
    bof = jnp.tile(b2.astype(jnp.float32) + br.astype(jnp.float32),
                   fold).reshape(1, nf)

    # ---- row tiling ---------------------------------------------------------
    # Sublane alignment of the folded block: 8 rows (f32) / 16 rows (bf16) of
    # the folded tile, i.e. `mult` original rows.
    sub = 16 if x_itemsize == 2 else 8
    mult = fold * sub
    M_align = _round_up(M, mult)

    # Target ~2048 original rows per step (HBM-bound post-fold; amortizes the
    # ~0.35us/step overhead), derive tm from M so padding waste stays bounded,
    # and keep >= 2 grid steps whenever possible so v7x's two TCs both work.
    target = 2048
    n_steps = _cdiv(M_align, target)
    if M_align >= 2 * mult:
        n_steps = max(n_steps, 2)
    tm = _round_up(_cdiv(M_align, n_steps), mult)

    def _tile_bytes(t):                         # VMEM model of the *folded* shapes
        tf = t // fold
        return (2 * tf * (kf + nf) * x_itemsize                # streamed x/out (x2 buf)
                + 2 * (kf * (hf + nf) + hf * nf) * w_itemsize  # resident weights (alloc x2)
                + 2 * (hf + nf) * 4                            # biases (f32)
                + tf * (hf + 2 * nf) * 4)                      # live f32 intermediates

    vmem_budget = 24 * 1024 * 1024              # headroom under the 32 MiB scoped limit
    while tm > mult and _tile_bytes(tm) > vmem_budget:
        tm -= mult

    M_pad = _round_up(M_align, tm)
    grid = (M_pad // tm,)

    x2d = x.reshape(M, in_dim)
    if M_pad != M:
        x2d = jnp.pad(x2d, ((0, M_pad - M), (0, 0)))
    xf = x2d.reshape(M_pad // fold, kf)         # row-major fold -> lane-dense loads

    flops = 2 * M_pad * (in_dim * h_dim + h_dim * out_dim + in_dim * out_dim)
    bytes_accessed = (M_pad * (in_dim + out_dim) * x_itemsize
                      + (kf * (hf + nf) + hf * nf) * w_itemsize
                      + (hf + nf) * 4)

    out_f = pl.pallas_call(
        _patch_embed_kernel,
        out_shape=jax.ShapeDtypeStruct((M_pad // fold, nf), x.dtype),
        grid_spec=pltpu.PrefetchScalarGridSpec(
            num_scalar_prefetch=0,
            grid=grid,
            in_specs=[
                pl.BlockSpec((tm // fold, kf), lambda i: (i, 0)),   # x tile (streamed)
                pl.BlockSpec((kf, hf + nf), lambda i: (0, 0)),      # [W1f | Wrf] (const)
                pl.BlockSpec((1, hf), lambda i: (0, 0)),            # b1 (folded, f32)
                pl.BlockSpec((hf, nf), lambda i: (0, 0)),           # W2f (const)
                pl.BlockSpec((1, nf), lambda i: (0, 0)),            # b2 + br (folded, f32)
            ],
            out_specs=pl.BlockSpec((tm // fold, nf), lambda i: (i, 0)),
        ),
        compiler_params=pltpu.CompilerParams(
            dimension_semantics=("parallel",),        # v7x: steps split across 2 TCs
            vmem_limit_bytes=32 * 1024 * 1024,
        ),
        cost_estimate=pl.CostEstimate(
            flops=flops, transcendentals=0, bytes_accessed=bytes_accessed),
    )(xf, wxf, b1f, w2f, bof)

    out2d = out_f.reshape(M_pad, out_dim)[:M]   # unfold (row-major) + drop pad rows
    return out2d.reshape(batch, seq, out_dim)


def _reference(x, w1, b1, w2, b2, wr, br):
    hid = jax.nn.relu(x @ w1 + b1)
    out = hid @ w2 + b2
    res = x @ wr + br
    return out + res


if __name__ == "__main__":
    # Module hyperparams (small, consistent with the forward pass)
    batch, seq = 2, 8
    in_dim, h_dim, out_dim = 16, 32, 32

    key = jax.random.PRNGKey(0)
    ks = jax.random.split(key, 7)

    # Deterministic synthetic parameters, stored as (in, out) = W^T of the
    # PyTorch nn.Linear weight (shape (out, in)).
    x = jax.random.normal(ks[0], (batch, seq, in_dim), dtype=jnp.float32)
    w1 = jax.random.normal(ks[1], (in_dim, h_dim), dtype=jnp.float32) * 0.1
    b1 = jax.random.normal(ks[2], (h_dim,), dtype=jnp.float32) * 0.1
    w2 = jax.random.normal(ks[3], (h_dim, out_dim), dtype=jnp.float32) * 0.1
    b2 = jax.random.normal(ks[4], (out_dim,), dtype=jnp.float32) * 0.1
    wr = jax.random.normal(ks[5], (in_dim, out_dim), dtype=jnp.float32) * 0.1
    br = jax.random.normal(ks[6], (out_dim,), dtype=jnp.float32) * 0.1

    y = patch_embedding(x, w1, b1, w2, b2, wr, br)
    y = jax.block_until_ready(y)

    y_ref = _reference(x, w1, b1, w2, b2, wr, br)
    assert y.shape == (batch, seq, out_dim)
    assert jnp.allclose(y, y_ref, atol=1e-5, rtol=1e-5), "mismatch vs reference"

    # TODO(synk): nn.Dropout with p > 0 (training mode) is not implemented;
    # the module default p=0.0 makes it an identity, which is what is fused.
    print("KERNEL_OK")
</pallas_src>

<mosaic_0001>
module attributes {stable_mosaic.version = 11 : i64} {
  func.func @_patch_embed_kernel(%arg0: i32, %arg1: memref<8x128xf32, #tpu.memory_space<vmem>>, %arg2: memref<128x512xf32, #tpu.memory_space<vmem>>, %arg3: memref<1x256xf32, #tpu.memory_space<vmem>>, %arg4: memref<256x256xf32, #tpu.memory_space<vmem>>, %arg5: memref<1x256xf32, #tpu.memory_space<vmem>>, %arg6: memref<8x256xf32, #tpu.memory_space<vmem>>) attributes {dimension_semantics = [#tpu.dimension_semantics<parallel>], iteration_bounds = array<i64: 1>, scalar_prefetch = 0 : i64, scratch_operands = 0 : i64, tpu.core_type = #tpu.core_type<tc>, window_params = [{transform_indices = @transform_0, window_bounds = array<i64: 8, 128>}, {pipeline_mode = #tpu.pipeline_mode<synchronous>, transform_indices = @transform_1, window_bounds = array<i64: 128, 512>}, {pipeline_mode = #tpu.pipeline_mode<synchronous>, transform_indices = @transform_2, window_bounds = array<i64: 1, 256>}, {pipeline_mode = #tpu.pipeline_mode<synchronous>, transform_indices = @transform_3, window_bounds = array<i64: 256, 256>}, {pipeline_mode = #tpu.pipeline_mode<synchronous>, transform_indices = @transform_4, window_bounds = array<i64: 1, 256>}, {transform_indices = @transform_5, window_bounds = array<i64: 8, 256>}]} {
    %c0 = arith.constant 0 : index
    %c0_0 = arith.constant 0 : index
    %0 = vector.load %arg1[%c0, %c0_0] : memref<8x128xf32, #tpu.memory_space<vmem>>, vector<8x128xf32>
    %c0_1 = arith.constant 0 : index
    %c0_2 = arith.constant 0 : index
    %1 = vector.load %arg2[%c0_1, %c0_2] : memref<128x512xf32, #tpu.memory_space<vmem>>, vector<128x512xf32>
    %cst = arith.constant dense<0.000000e+00> : vector<8x512xf32>
    %2 = tpu.matmul %0, %1, %cst {dimension_numbers = #tpu.dot_dimension_numbers<[1], [0], [0], [1], [0, 0, 1, 1], [], []>} : vector<8x128xf32>, vector<128x512xf32>, vector<8x512xf32> -> vector<8x512xf32>
    %3 = vector.extract_strided_slice %2 {offsets = [0, 0], sizes = [8, 256], strides = [1, 1]} : vector<8x512xf32> to vector<8x256xf32>
    %c0_3 = arith.constant 0 : index
    %c0_4 = arith.constant 0 : index
    %4 = vector.load %arg3[%c0_3, %c0_4] : memref<1x256xf32, #tpu.memory_space<vmem>>, vector<1x256xf32>
    %5 = vector.broadcast %4 : vector<1x256xf32> to vector<8x256xf32>
    %6 = arith.addf %3, %5 : vector<8x256xf32>
    %cst_5 = arith.constant 0.000000e+00 : f32
    %7 = vector.broadcast %cst_5 : f32 to vector<8x256xf32>
    %8 = arith.maximumf %6, %7 : vector<8x256xf32>
    %9 = vector.extract_strided_slice %2 {offsets = [0, 256], sizes = [8, 256], strides = [1, 1]} : vector<8x512xf32> to vector<8x256xf32>
    %c0_6 = arith.constant 0 : index
    %c0_7 = arith.constant 0 : index
    %10 = vector.load %arg4[%c0_6, %c0_7] : memref<256x256xf32, #tpu.memory_space<vmem>>, vector<256x256xf32>
    %cst_8 = arith.constant dense<0.000000e+00> : vector<8x256xf32>
    %11 = tpu.matmul %8, %10, %cst_8 {dimension_numbers = #tpu.dot_dimension_numbers<[1], [0], [0], [1], [0, 0, 1, 1], [], []>} : vector<8x256xf32>, vector<256x256xf32>, vector<8x256xf32> -> vector<8x256xf32>
    %12 = arith.addf %11, %9 : vector<8x256xf32>
    %c0_9 = arith.constant 0 : index
    %c0_10 = arith.constant 0 : index
    %13 = vector.load %arg5[%c0_9, %c0_10] : memref<1x256xf32, #tpu.memory_space<vmem>>, vector<1x256xf32>
    %14 = vector.broadcast %13 : vector<1x256xf32> to vector<8x256xf32>
    %15 = arith.addf %12, %14 : vector<8x256xf32>
    %c0_11 = arith.constant 0 : index
    %c0_12 = arith.constant 0 : index
    %16 = vector.load %arg6[%c0_11, %c0_12] : memref<8x256xf32, #tpu.memory_space<vmem>>, vector<8x256xf32>
    tpu.vector_store %arg6[%c0_11, %c0_12], %15 {strides = array<i32>} : memref<8x256xf32, #tpu.memory_space<vmem>>, vector<8x256xf32>,
    return
  }
  func.func @transform_0(%arg0: i32) -> (i32, i32) {
    %c0_i32 = arith.constant 0 : i32
    %c0_i32_0 = arith.constant 0 : i32
    return %arg0, %c0_i32 : i32, i32
  }
  func.func @transform_1(%arg0: i32) -> (i32, i32) {
    %c0_i32 = arith.constant 0 : i32
    %c0_i32_0 = arith.constant 0 : i32
    %c0_i32_1 = arith.constant 0 : i32
    return %c0_i32, %c0_i32_0 : i32, i32
  }
  func.func @transform_2(%arg0: i32) -> (i32, i32) {
    %c0_i32 = arith.constant 0 : i32
    %c0_i32_0 = arith.constant 0 : i32
    %c0_i32_1 = arith.constant 0 : i32
    return %c0_i32, %c0_i32_0 : i32, i32
  }
  func.func @transform_3(%arg0: i32) -> (i32, i32) {
    %c0_i32 = arith.constant 0 : i32
    %c0_i32_0 = arith.constant 0 : i32
    %c0_i32_1 = arith.constant 0 : i32
    return %c0_i32, %c0_i32_0 : i32, i32
  }
  func.func @transform_4(%arg0: i32) -> (i32, i32) {
    %c0_i32 = arith.constant 0 : i32
    %c0_i32_0 = arith.constant 0 : i32
    %c0_i32_1 = arith.constant 0 : i32
    return %c0_i32, %c0_i32_0 : i32, i32
  }
  func.func @transform_5(%arg0: i32) -> (i32, i32) {
    %c0_i32 = arith.constant 0 : i32
    %c0_i32_0 = arith.constant 0 : i32
    return %arg0, %c0_i32 : i32, i32
  }
}

</mosaic_0001>

<llo_original>
// kernel: tile.18
$region0: #{tile.18}
  #allocation0 [shape = 's32[1]{0}', space=sflag, size = 0x4, scoped, tag = 'scoped memory for tile.18']
  %s0 = inlined_call_operand.vmem [shape: f32[32], index: 0, kind: input, shape index: {}]
  %s1 = inlined_call_operand.vmem [shape: f32[8,32], index: 1, kind: output, shape index: {}]
  // Predicated region
  $region2: #{tile.18} parent=0 // pred_check
    _
  $region3: #{tile.18} parent=0 // pred_check_branch
    %3 = sbr.rel (0) target = $region5
  $region4: #{tile.18} parent=0 // pred_region
    _
  $region5: #{tile.18} parent=0 // pred_fallthru
    _
  %v4 = vld [vmem:[%s0] ss:$0 sm:$0xff]
  %5 = vst [vmem:[%s1] sm:$0xff] %v4

// kernel: tile.19
$region0: #{tile.19}
  %s0 = inlined_call_operand.vmem [shape: f32[8,32], index: 0, kind: input, shape index: {}]
  %s1 = inlined_call_operand.vmem [shape: f32[1,256], index: 1, kind: output, shape index: {}]
  $region1: #{tile.19} parent=0
    #allocation0 [shape = 'u8[8192]{0}', space=vmem, size = 0x2000, scoped, tag = 'scoped mem for output reshape']
    %s2 = smov 3
    %v3 = vld [vmem:[%s0] ss:$4 sm:%s2]
    %vm4 = vcmask 261120
    %5 = vst.msk [vmem:[#allocation0] ss:$8 sm:$0x3] %vm4, %v3
    %s6 = scalar_lea.vmem %s0, 3
    %s7 = smov 3
    %v8 = vld [vmem:[%s6] ss:$4 sm:%s7]
    %9 = vrot.lane.b32.xlu0 %v8, 96
    %v10 = vpop.permute.xlu0 %9
    %vm11 = vcmask 1048320
    %12 = vst.msk [vmem:[#allocation0] ss:$8 sm:$0x3] %vm11, %v10
    %s13 = scalar_lea.vmem %s0, 2
    %s14 = smov 3
    %v15 = vld [vmem:[%s13] ss:$4 sm:%s14]
    %16 = vrot.lane.b32.xlu0 %v15, 64
    %v17 = vpop.permute.xlu0 %16
    %vm18 = vcmask 785920
    %19 = vst.msk [vmem:[#allocation0] ss:$8 sm:$0x3] %vm18, %v17
    %s20 = scalar_lea.vmem %s0, 1
    %s21 = smov 3
    %v22 = vld [vmem:[%s20] ss:$4 sm:%s21]
    %23 = vrot.lane.b32.xlu0 %v22, 32
    %v24 = vpop.permute.xlu0 %23
    %vm25 = vcmask 523520
    %26 = vst.msk [vmem:[#allocation0] ss:$8 sm:$0x3] %vm25, %v24
    %s28 = sshllo.u32 0, 1
    %v30 = vld [vmem:[#allocation0] sm:%s28]
    %s31 = sshllo.u32 0, 1
    %32 = vst [vmem:[%s1] sm:%s31] %v30
    %s33 = scalar_lea.vmem [#allocation0], 8
    %v34 = vld [vmem:[%s33] sm:%s28]
    %s35 = sshllo.u32 0, 1
    %s36 = scalar_lea.vmem %s1, 1
    %37 = vst [vmem:[%s36] sm:%s35] %v34

// kernel: patch_embedding.1
$region0: #{patch_embedding.1}
  #allocation0 [shape = 'u32[]', space=smem, size = 0x4, offset = 0x4, fixed_abs, tag = 'smem constant byte address 0x4 - core index']
  #allocation1 [shape = 'u32[144,128]{1,0:T(1,128)}', space=vmem, size = 0x12000, scoped, tag = 'internal scratch']
  %s0 = inlined_call_operand.vmem [shape: f32[8,128], index: 0, kind: input, shape index: {}]
  %s1 = inlined_call_operand.vmem [shape: f32[128,512], index: 1, kind: input, shape index: {}]
  %s2 = inlined_call_operand.vmem [shape: f32[1,256], index: 2, kind: input, shape index: {}]
  %s3 = inlined_call_operand.vmem [shape: f32[256,256], index: 3, kind: input, shape index: {}]
  %s4 = inlined_call_operand.vmem [shape: f32[1,256], index: 4, kind: input, shape index: {}]
  %s5 = inlined_call_operand.vmem [shape: f32[8,256], index: 5, kind: output, shape index: {}]
  %s6 = sld [smem:[#allocation0]]
  $region30: #{patch_embedding.1} parent=0
    _
  %s8 = ssub.s32 1, %s6
  %s9 = scalar_select 0, %s8, %s6
  // Predicated region
  $region2: #{patch_embedding.1} parent=0 // pred_check
    _
  $region3: #{patch_embedding.1} parent=0 // pred_check_branch
    %11 = sbr.rel (0) target = $region5
  $region4: #{patch_embedding.1} parent=0 // pred_region
    _
  $region5: #{patch_embedding.1} parent=0 // pred_fallthru
    _
  // Predicated region
  $region6: #{patch_embedding.1} parent=0 // pred_check
    _
  $region7: #{patch_embedding.1} parent=0 // pred_check_branch
    %13 = sbr.rel (0) target = $region9
  $region8: #{patch_embedding.1} parent=0 // pred_region
    _
  $region9: #{patch_embedding.1} parent=0 // pred_fallthru
    _
  // Predicated region
  $region10: #{patch_embedding.1} parent=0 // pred_check
    _
  $region11: #{patch_embedding.1} parent=0 // pred_check_branch
    %15 = sbr.rel (0) target = $region13
  $region12: #{patch_embedding.1} parent=0 // pred_region
    _
  $region13: #{patch_embedding.1} parent=0 // pred_fallthru
    _
  // Predicated region
  $region14: #{patch_embedding.1} parent=0 // pred_check
    _
  $region15: #{patch_embedding.1} parent=0 // pred_check_branch
    %17 = sbr.rel (0) target = $region17
  $region16: #{patch_embedding.1} parent=0 // pred_region
    _
  $region17: #{patch_embedding.1} parent=0 // pred_fallthru
    _
  // Predicated region
  $region18: #{patch_embedding.1} parent=0 // pred_check
    _
  $region19: #{patch_embedding.1} parent=0 // pred_check_branch
    %19 = sbr.rel (0) target = $region21
  $region20: #{patch_embedding.1} parent=0 // pred_region
    _
  $region21: #{patch_embedding.1} parent=0 // pred_fallthru
    _
  %v20 = vld [vmem:[%s0] sm:$0xff]
  %v21 = vld [vmem:[%s1] sm:$0xff]
  %v22 = vld [vmem:[%s1 + $0x8] sm:$0xff]
  %v23 = vld [vmem:[%s1 + $0x10] sm:$0xff]
  %v24 = vld [vmem:[%s1 + $0x18] sm:$0xff]
  %v25 = vld [vmem:[%s1 + $0x20] sm:$0xff]
  %v26 = vld [vmem:[%s1 + $0x28] sm:$0xff]
  %v27 = vld [vmem:[%s1 + $0x30] sm:$0xff]
  %v28 = vld [vmem:[%s1 + $0x38] sm:$0xff]
  %v29 = vld [vmem:[%s1 + $0x40] sm:$0xff]
  %v30 = vld [vmem:[%s1 + $0x48] sm:$0xff]
  %v31 = vld [vmem:[%s1 + $0x50] sm:$0xff]
  %v32 = vld [vmem:[%s1 + $0x58] sm:$0xff]
  %v33 = vld [vmem:[%s1 + $0x60] sm:$0xff]
  %v34 = vld [vmem:[%s1 + $0x68] sm:$0xff]
  %v35 = vld [vmem:[%s1 + $0x70] sm:$0xff]
  %v36 = vld [vmem:[%s1 + $0x78] sm:$0xff]
  %v37 = vld [vmem:[%s1 + $0x80] sm:$0xff]
  %v38 = vld [vmem:[%s1 + $0x88] sm:$0xff]
  %v39 = vld [vmem:[%s1 + $0x90] sm:$0xff]
  %v40 = vld [vmem:[%s1 + $0x98] sm:$0xff]
  %v41 = vld [vmem:[%s1 + $0xa0] sm:$0xff]
  %v42 = vld [vmem:[%s1 + $0xa8] sm:$0xff]
  %v43 = vld [vmem:[%s1 + $0xb0] sm:$0xff]
  %v44 = vld [vmem:[%s1 + $0xb8] sm:$0xff]
  %v45 = vld [vmem:[%s1 + $0xc0] sm:$0xff]
  %v46 = vld [vmem:[%s1 + $0xc8] sm:$0xff]
  %v47 = vld [vmem:[%s1 + $0xd0] sm:$0xff]
  %v48 = vld [vmem:[%s1 + $0xd8] sm:$0xff]
  %v49 = vld [vmem:[%s1 + $0xe0] sm:$0xff]
  %v50 = vld [vmem:[%s1 + $0xe8] sm:$0xff]
  %v51 = vld [vmem:[%s1 + $0xf0] sm:$0xff]
  %v52 = vld [vmem:[%s1 + $0xf8] sm:$0xff]
  %v53 = vld [vmem:[%s1 + $0x100] sm:$0xff]
  %v54 = vld [vmem:[%s1 + $0x108] sm:$0xff]
  %v55 = vld [vmem:[%s1 + $0x110] sm:$0xff]
  %v56 = vld [vmem:[%s1 + $0x118] sm:$0xff]
  %v57 = vld [vmem:[%s1 + $0x120] sm:$0xff]
  %v58 = vld [vmem:[%s1 + $0x128] sm:$0xff]
  %v59 = vld [vmem:[%s1 + $0x130] sm:$0xff]
  %v60 = vld [vmem:[%s1 + $0x138] sm:$0xff]
  %v61 = vld [vmem:[%s1 + $0x140] sm:$0xff]
  %v62 = vld [vmem:[%s1 + $0x148] sm:$0xff]
  %v63 = vld [vmem:[%s1 + $0x150] sm:$0xff]
  %v64 = vld [vmem:[%s1 + $0x158] sm:$0xff]
  %v65 = vld [vmem:[%s1 + $0x160] sm:$0xff]
  %v66 = vld [vmem:[%s1 + $0x168] sm:$0xff]
  %v67 = vld [vmem:[%s1 + $0x170] sm:$0xff]
  %v68 = vld [vmem:[%s1 + $0x178] sm:$0xff]
  %v69 = vld [vmem:[%s1 + $0x180] sm:$0xff]
  %v70 = vld [vmem:[%s1 + $0x188] sm:$0xff]
  %v71 = vld [vmem:[%s1 + $0x190] sm:$0xff]
  %v72 = vld [vmem:[%s1 + $0x198] sm:$0xff]
  %v73 = vld [vmem:[%s1 + $0x1a0] sm:$0xff]
  %v74 = vld [vmem:[%s1 + $0x1a8] sm:$0xff]
  %v75 = vld [vmem:[%s1 + $0x1b0] sm:$0xff]
  %v76 = vld [vmem:[%s1 + $0x1b8] sm:$0xff]
  %v77 = vld [vmem:[%s1 + $0x1c0] sm:$0xff]
  %v78 = vld [vmem:[%s1 + $0x1c8] sm:$0xff]
  %v79 = vld [vmem:[%s1 + $0x1d0] sm:$0xff]
  %v80 = vld [vmem:[%s1 + $0x1d8] sm:$0xff]
  %v81 = vld [vmem:[%s1 + $0x1e0] sm:$0xff]
  %v82 = vld [vmem:[%s1 + $0x1e8] sm:$0xff]
  %v83 = vld [vmem:[%s1 + $0x1f0] sm:$0xff]
  %v84 = vld [vmem:[%s1 + $0x1f8] sm:$0xff]
  %85 = vmatprep.subr.mxu0 %v22
  %86 = vmatpush1.msra.mxu0 %v21
  %87 = vmatprep.subr.mxu0 %v26
  %88 = vmatpush1.msra.mxu0 %v25
  %89 = vmatprep.subr.mxu0 %v30
  %90 = vmatpush1.msra.mxu0 %v29
  %91 = vmatprep.subr.mxu0 %v34
  %92 = vmatpush1.msra.mxu0 %v33
  %93 = vmatprep.subr.mxu0 %v38
  %94 = vmatpush1.msra.mxu0 %v37
  %95 = vmatprep.subr.mxu0 %v42
  %96 = vmatpush1.msra.mxu0 %v41
  %97 = vmatprep.subr.mxu0 %v46
  %98 = vmatpush1.msra.mxu0 %v45
  %99 = vmatprep.subr.mxu0 %v50
  %100 = vmatpush1.msra.mxu0 %v49
  %101 = vmatprep.subr.mxu0 %v54
  %102 = vmatpush1.msra.mxu0 %v53
  %103 = vmatprep.subr.mxu0 %v58
  %104 = vmatpush1.msra.mxu0 %v57
  %105 = vmatprep.subr.mxu0 %v62
  %106 = vmatpush1.msra.mxu0 %v61
  %107 = vmatprep.subr.mxu0 %v66
  %108 = vmatpush1.msra.mxu0 %v65
  %109 = vmatprep.subr.mxu0 %v70
  %110 = vmatpush1.msra.mxu0 %v69
  %111 = vmatprep.subr.mxu0 %v74
  %112 = vmatpush1.msra.mxu0 %v73
  %113 = vmatprep.subr.mxu0 %v78
  %114 = vmatpush1.msra.mxu0 %v77
  %115 = vmatprep.subr.mxu0 %v82
  %116 = vmatpush1.msra.mxu0 %v81
  %117 = vmatprep.subr.mxu0 0.0
  %118 = vmatpush1.msra.mxu0 0.0
  %119 = vmatprep.subr.mxu0 0.0
  %120 = vmatpush1.msra.mxu0 0.0
  %121 = vmatprep.subr.mxu0 0.0
  %122 = vmatpush1.msra.mxu0 0.0
  %123 = vmatprep.subr.mxu0 0.0
  %124 = vmatpush1.msra.mxu0 0.0
  %125 = vmatprep.subr.mxu0 0.0
  %126 = vmatpush1.msra.mxu0 0.0
  %127 = vmatprep.subr.mxu0 0.0
  %128 = vmatpush1.msra.mxu0 0.0
  %129 = vmatprep.subr.mxu0 0.0
  %130 = vmatpush1.msra.mxu0 0.0
  %131 = vmatprep.subr.mxu0 0.0
  %132 = vmatpush1.msra.mxu0 0.0
  %133 = vmatprep.subr.mxu0 0.0
  %134 = vmatpush1.msra.mxu0 0.0
  %135 = vmatprep.subr.mxu0 0.0
  %136 = vmatpush1.msra.mxu0 0.0
  %137 = vmatprep.subr.mxu0 0.0
  %138 = vmatpush1.msra.mxu0 0.0
  %139 = vmatprep.subr.mxu0 0.0
  %140 = vmatpush1.msra.mxu0 0.0
  %141 = vmatprep.subr.mxu0 0.0
  %142 = vmatpush1.msra.mxu0 0.0
  %143 = vmatprep.subr.mxu0 0.0
  %144 = vmatpush1.msra.mxu0 0.0
  %145 = vmatprep.subr.mxu0 0.0
  %146 = vmatpush1.msra.mxu0 0.0
  %147 = vmatprep.subr.mxu0 0.0
  %148 = vmatpush1.msra.mxu0 0.0
  %149 = vmatprep.mubr.f32.mxu0 0.0
  %150 = vmatmul.mubr.f32.gmra.mrb[0].mxu0 %v20
  %v151 = vpop.f32.mrb[0].mxu0
  %v152 = vadd.f32 0.0, %v151
  %v153 = vpop.f32.mrb[0].mxu0
  %v154 = vadd.f32 0.0, %v153
  %155 = vdwg.mxu0
  %156 = vmatprep.subr.mxu0 %v24
  %157 = vmatpush1.msra.mxu0 %v23
  %158 = vmatprep.subr.mxu0 %v28
  %159 = vmatpush1.msra.mxu0 %v27
  %160 = vmatprep.subr.mxu0 %v32
  %161 = vmatpush1.msra.mxu0 %v31
  %162 = vmatprep.subr.mxu0 %v36
  %163 = vmatpush1.msra.mxu0 %v35
  %164 = vmatprep.subr.mxu0 %v40
  %165 = vmatpush1.msra.mxu0 %v39
  %166 = vmatprep.subr.mxu0 %v44
  %167 = vmatpush1.msra.mxu0 %v43
  %168 = vmatprep.subr.mxu0 %v48
  %169 = vmatpush1.msra.mxu0 %v47
  %170 = vmatprep.subr.mxu0 %v52
  %171 = vmatpush1.msra.mxu0 %v51
  %172 = vmatprep.subr.mxu0 %v56
  %173 = vmatpush1.msra.mxu0 %v55
  %174 = vmatprep.subr.mxu0 %v60
  %175 = vmatpush1.msra.mxu0 %v59
  %176 = vmatprep.subr.mxu0 %v64
  %177 = vmatpush1.msra.mxu0 %v63
  %178 = vmatprep.subr.mxu0 %v68
  %179 = vmatpush1.msra.mxu0 %v67
  %180 = vmatprep.subr.mxu0 %v72
  %181 = vmatpush1.msra.mxu0 %v71
  %182 = vmatprep.subr.mxu0 %v76
  %183 = vmatpush1.msra.mxu0 %v75
  %184 = vmatprep.subr.mxu0 %v80
  %185 = vmatpush1.msra.mxu0 %v79
  %186 = vmatprep.subr.mxu0 %v84
  %187 = vmatpush1.msra.mxu0 %v83
  %188 = vmatprep.subr.mxu0 0.0
  %189 = vmatpush1.msra.mxu0 0.0
  %190 = vmatprep.subr.mxu0 0.0
  %191 = vmatpush1.msra.mxu0 0.0
  %192 = vmatprep.subr.mxu0 0.0
  %193 = vmatpush1.msra.mxu0 0.0
  %194 = vmatprep.subr.mxu0 0.0
  %195 = vmatpush1.msra.mxu0 0.0
  %196 = vmatprep.subr.mxu0 0.0
  %197 = vmatpush1.msra.mxu0 0.0
  %198 = vmatprep.subr.mxu0 0.0
  %199 = vmatpush1.msra.mxu0 0.0
  %200 = vmatprep.subr.mxu0 0.0
  %201 = vmatpush1.msra.mxu0 0.0
  %202 = vmatprep.subr.mxu0 0.0
  %203 = vmatpush1.msra.mxu0 0.0
  %204 = vmatprep.subr.mxu0 0.0
  %205 = vmatpush1.msra.mxu0 0.0
  %206 = vmatprep.subr.mxu0 0.0
  %207 = vmatpush1.msra.mxu0 0.0
  %208 = vmatprep.subr.mxu0 0.0
  %209 = vmatpush1.msra.mxu0 0.0
  %210 = vmatprep.subr.mxu0 0.0
  %211 = vmatpush1.msra.mxu0 0.0
  %212 = vmatprep.subr.mxu0 0.0
  %213 = vmatpush1.msra.mxu0 0.0
  %214 = vmatprep.subr.mxu0 0.0
  %215 = vmatpush1.msra.mxu0 0.0
  %216 = vmatprep.subr.mxu0 0.0
  %217 = vmatpush1.msra.mxu0 0.0
  %218 = vmatprep.subr.mxu0 0.0
  %219 = vmatpush1.msra.mxu0 0.0
  %220 = vmatprep.mubr.f32.mxu0 0.0
  %221 = vmatmul.mubr.f32.gmra.mrb[0].mxu0 %v20
  %v222 = vpop.f32.mrb[0].mxu0
  %v223 = vadd.f32 0.0, %v222
  %v224 = vpop.f32.mrb[0].mxu0
  %v225 = vadd.f32 0.0, %v224
  %226 = vdwg.mxu0
  %v227 = vld [vmem:[%s2] sm:$0x3]
  %v229 = vlaneseq
  %v230 = vshrl.u32 %v229, 7
  %v231 = vsub.s32 0, %v230
  %v232 = vrot.slane %v227, %v231
  %v233 = vlaneseq
  %v234 = vshrl.u32 %v233, 7
  %v235 = vsub.s32 1, %v234
  %v236 = vrot.slane %v227, %v235
  %v239 = vadd.f32 %v152, %v232
  %v240 = vadd.f32 %v154, %v236
  %v241 = vmax.f32 %v239, 0.0
  %v242 = vmax.f32 %v240, 0.0
  %v243 = vld [vmem:[%s3] sm:$0xff]
  %v244 = vld [vmem:[%s3 + $0x8] sm:$0xff]
  %v245 = vld [vmem:[%s3 + $0x10] sm:$0xff]
  %v246 = vld [vmem:[%s3 + $0x18] sm:$0xff]
  %v247 = vld [vmem:[%s3 + $0x20] sm:$0xff]
  %v248 = vld [vmem:[%s3 + $0x28] sm:$0xff]
  %v249 = vld [vmem:[%s3 + $0x30] sm:$0xff]
  %v250 = vld [vmem:[%s3 + $0x38] sm:$0xff]
  %v251 = vld [vmem:[%s3 + $0x40] sm:$0xff]
  %v252 = vld [vmem:[%s3 + $0x48] sm:$0xff]
  %v253 = vld [vmem:[%s3 + $0x50] sm:$0xff]
  %v254 = vld [vmem:[%s3 + $0x58] sm:$0xff]
  %v255 = vld [vmem:[%s3 + $0x60] sm:$0xff]
  %v256 = vld [vmem:[%s3 + $0x68] sm:$0xff]
  %v257 = vld [vmem:[%s3 + $0x70] sm:$0xff]
  %v258 = vld [vmem:[%s3 + $0x78] sm:$0xff]
  %v259 = vld [vmem:[%s3 + $0x80] sm:$0xff]
  %v260 = vld [vmem:[%s3 + $0x88] sm:$0xff]
  %v261 = vld [vmem:[%s3 + $0x90] sm:$0xff]
  %v262 = vld [vmem:[%s3 + $0x98] sm:$0xff]
  %v263 = vld [vmem:[%s3 + $0xa0] sm:$0xff]
  %v264 = vld [vmem:[%s3 + $0xa8] sm:$0xff]
  %v265 = vld [vmem:[%s3 + $0xb0] sm:$0xff]
  %v266 = vld [vmem:[%s3 + $0xb8] sm:$0xff]
  %v267 = vld [vmem:[%s3 + $0xc0] sm:$0xff]
  %v268 = vld [vmem:[%s3 + $0xc8] sm:$0xff]
  %v269 = vld [vmem:[%s3 + $0xd0] sm:$0xff]
  %v270 = vld [vmem:[%s3 + $0xd8] sm:$0xff]
  %v271 = vld [vmem:[%s3 + $0xe0] sm:$0xff]
  %v272 = vld [vmem:[%s3 + $0xe8] sm:$0xff]
  %v273 = vld [vmem:[%s3 + $0xf0] sm:$0xff]
  %v274 = vld [vmem:[%s3 + $0xf8] sm:$0xff]
  %v275 = vld [vmem:[%s3 + $0x100] sm:$0xff]
  %v276 = vld [vmem:[%s3 + $0x108] sm:$0xff]
  %v277 = vld [vmem:[%s3 + $0x110] sm:$0xff]
  %v278 = vld [vmem:[%s3 + $0x118] sm:$0xff]
  %v279 = vld [vmem:[%s3 + $0x120] sm:$0xff]
  %v280 = vld [vmem:[%s3 + $0x128] sm:$0xff]
  %v281 = vld [vmem:[%s3 + $0x130] sm:$0xff]
  %v282 = vld [vmem:[%s3 + $0x138] sm:$0xff]
  %v283 = vld [vmem:[%s3 + $0x140] sm:$0xff]
  %v284 = vld [vmem:[%s3 + $0x148] sm:$0xff]
  %v285 = vld [vmem:[%s3 + $0x150] sm:$0xff]
  %v286 = vld [vmem:[%s3 + $0x158] sm:$0xff]
  %v287 = vld [vmem:[%s3 + $0x160] sm:$0xff]
  %v288 = vld [vmem:[%s3 + $0x168] sm:$0xff]
  %v289 = vld [vmem:[%s3 + $0x170] sm:$0xff]
  %v290 = vld [vmem:[%s3 + $0x178] sm:$0xff]
  %v291 = vld [vmem:[%s3 + $0x180] sm:$0xff]
  %v292 = vld [vmem:[%s3 + $0x188] sm:$0xff]
  %v293 = vld [vmem:[%s3 + $0x190] sm:$0xff]
  %v294 = vld [vmem:[%s3 + $0x198] sm:$0xff]
  %v295 = vld [vmem:[%s3 + $0x1a0] sm:$0xff]
  %v296 = vld [vmem:[%s3 + $0x1a8] sm:$0xff]
  %v297 = vld [vmem:[%s3 + $0x1b0] sm:$0xff]
  %v298 = vld [vmem:[%s3 + $0x1b8] sm:$0xff]
  %v299 = vld [vmem:[%s3 + $0x1c0] sm:$0xff]
  %v300 = vld [vmem:[%s3 + $0x1c8] sm:$0xff]
  %v301 = vld [vmem:[%s3 + $0x1d0] sm:$0xff]
  %v302 = vld [vmem:[%s3 + $0x1d8] sm:$0xff]
  %v303 = vld [vmem:[%s3 + $0x1e0] sm:$0xff]
  %v304 = vld [vmem:[%s3 + $0x1e8] sm:$0xff]
  %v305 = vld [vmem:[%s3 + $0x1f0] sm:$0xff]
  %v306 = vld [vmem:[%s3 + $0x1f8] sm:$0xff]
  %307 = vmatprep.subr.mxu0 %v244
  %308 = vmatpush1.msra.mxu0 %v243
  %309 = vmatprep.subr.mxu0 %v246
  %310 = vmatpush1.msra.mxu0 %v245
  %311 = vmatprep.subr.mxu0 %v248
  %312 = vmatpush1.msra.mxu0 %v247
  %313 = vmatprep.subr.mxu0 %v250
  %314 = vmatpush1.msra.mxu0 %v249
  %315 = vmatprep.subr.mxu0 %v252
  %316 = vmatpush1.msra.mxu0 %v251
  %317 = vmatprep.subr.mxu0 %v254
  %318 = vmatpush1.msra.mxu0 %v253
  %319 = vmatprep.subr.mxu0 %v256
  %320 = vmatpush1.msra.mxu0 %v255
  %321 = vmatprep.subr.mxu0 %v258
  %322 = vmatpush1.msra.mxu0 %v257
  %323 = vmatprep.subr.mxu0 %v260
  %324 = vmatpush1.msra.mxu0 %v259
  %325 = vmatprep.subr.mxu0 %v262
  %326 = vmatpush1.msra.mxu0 %v261
  %327 = vmatprep.subr.mxu0 %v264
  %328 = vmatpush1.msra.mxu0 %v263
  %329 = vmatprep.subr.mxu0 %v266
  %330 = vmatpush1.msra.mxu0 %v265
  %331 = vmatprep.subr.mxu0 %v268
  %332 = vmatpush1.msra.mxu0 %v267
  %333 = vmatprep.subr.mxu0 %v270
  %334 = vmatpush1.msra.mxu0 %v269
  %335 = vmatprep.subr.mxu0 %v272
  %336 = vmatpush1.msra.mxu0 %v271
  %337 = vmatprep.subr.mxu0 %v274
  %338 = vmatpush1.msra.mxu0 %v273
  %339 = vmatprep.subr.mxu0 %v276
  %340 = vmatpush1.msra.mxu0 %v275
  %341 = vmatprep.subr.mxu0 %v278
  %342 = vmatpush1.msra.mxu0 %v277
  %343 = vmatprep.subr.mxu0 %v280
  %344 = vmatpush1.msra.mxu0 %v279
  %345 = vmatprep.subr.mxu0 %v282
  %346 = vmatpush1.msra.mxu0 %v281
  %347 = vmatprep.subr.mxu0 %v284
  %348 = vmatpush1.msra.mxu0 %v283
  %349 = vmatprep.subr.mxu0 %v286
  %350 = vmatpush1.msra.mxu0 %v285
  %351 = vmatprep.subr.mxu0 %v288
  %352 = vmatpush1.msra.mxu0 %v287
  %353 = vmatprep.subr.mxu0 %v290
  %354 = vmatpush1.msra.mxu0 %v289
  %355 = vmatprep.subr.mxu0 %v292
  %356 = vmatpush1.msra.mxu0 %v291
  %357 = vmatprep.subr.mxu0 %v294
  %358 = vmatpush1.msra.mxu0 %v293
  %359 = vmatprep.subr.mxu0 %v296
  %360 = vmatpush1.msra.mxu0 %v295
  %361 = vmatprep.subr.mxu0 %v298
  %362 = vmatpush1.msra.mxu0 %v297
  %363 = vmatprep.subr.mxu0 %v300
  %364 = vmatpush1.msra.mxu0 %v299
  %365 = vmatprep.subr.mxu0 %v302
  %366 = vmatpush1.msra.mxu0 %v301
  %367 = vmatprep.subr.mxu0 %v304
  %368 = vmatpush1.msra.mxu0 %v303
  %369 = vmatprep.subr.mxu0 %v306
  %370 = vmatpush1.msra.mxu0 %v305
  %371 = vmatprep.mubr.f32.mxu0 %v242
  %372 = vmatmul.mubr.f32.gmra.mrb[0].mxu0 %v241
  %v373 = vpop.f32.mrb[0].mxu0
  %v374 = vadd.f32 %v223, %v373
  %v375 = vpop.f32.mrb[0].mxu0
  %v376 = vadd.f32 %v225, %v375
  %377 = vdwg.mxu0
  %v378 = vld [vmem:[%s4] sm:$0x3]
  %v380 = vlaneseq
  %v381 = vshrl.u32 %v380, 7
  %v382 = vsub.s32 0, %v381
  %v383 = vrot.slane %v378, %v382
  %v384 = vlaneseq
  %v385 = vshrl.u32 %v384, 7
  %v386 = vsub.s32 1, %v385
  %v387 = vrot.slane %v378, %v386
  %v390 = vadd.f32 %v374, %v383
  %v391 = vadd.f32 %v376, %v387
  %392 = vst [vmem:[%s5] sm:$0xff] %v390
  %393 = vst [vmem:[%s5 + $0x8] sm:$0xff] %v391
  // Predicated region
  $region22: #{patch_embedding.1} parent=0 // pred_check
    _
  $region23: #{patch_embedding.1} parent=0 // pred_check_branch
    %395 = sbr.rel (0) target = $region25
  $region24: #{patch_embedding.1} parent=0 // pred_region
    _
  $region25: #{patch_embedding.1} parent=0 // pred_fallthru
    _
  // Predicated region
  $region26: #{patch_embedding.1} parent=0 // pred_check
    _
  $region27: #{patch_embedding.1} parent=0 // pred_check_branch
    %397 = sbr.rel (0) target = $region29
  $region28: #{patch_embedding.1} parent=0 // pred_region
    _
  $region29: #{patch_embedding.1} parent=0 // pred_fallthru
    _

</llo_original>
